<compile_context>
chip_gen: v7x
topology: tpu7x:2x2x1
jax: 0.10.0
libtpu: 0.0.40
codegen_flags: <defaults>
</compile_context>

<pallas_src>
import jax
import jax.numpy as jnp
from jax.experimental import pallas as pl
from jax.experimental.pallas import tpu as pltpu


# ----------------------------------------------------------------------------
# Kernels
# ----------------------------------------------------------------------------
def _wss_kernel_unrolled(sqw_ref, x_ref, o_ref):
    """Unrolled-channel path (typical: C is small).

    sqw_ref: (C,) sqrt(weights) in SMEM (scalar prefetch).
    x_ref / o_ref: (TB, C, TR, 128) VMEM blocks.  C is an outer dim, so every
    per-channel (TB, TR, 128) slab is fully dense in vregs; the channel
    max/sum are plain VPU ops (no XLU), exp/rsqrt go to the EUP.
    """
    C = x_ref.shape[1]

    # Running per-pixel max over channels (VPU).
    m = x_ref[:, 0, :, :].astype(jnp.float32)
    for c in range(1, C):
        m = jnp.maximum(m, x_ref[:, c, :, :].astype(jnp.float32))

    # t_c = sqrt(w_c) * exp(x_c - m);  norm_sqr = sum_c t_c^2  (== sum_c w_c exp^2)
    t = []
    norm_sqr = None
    for c in range(C):
        tc = sqw_ref[c] * jnp.exp(x_ref[:, c, :, :].astype(jnp.float32) - m)
        t.append(tc)
        norm_sqr = tc * tc if norm_sqr is None else norm_sqr + tc * tc

    inv_norm = jax.lax.rsqrt(norm_sqr)                       # EUP
    for c in range(C):
        o_ref[:, c, :, :] = (t[c] * inv_norm).astype(o_ref.dtype)


def _wss_kernel_vector(x_ref, sqw_ref, o_ref):
    """Vectorized fallback for large C (avoids a huge unrolled trace).

    x_ref / o_ref: (TB, C, TR, 128); sqw_ref: (1, C, 1, 1) sqrt(weights) in VMEM.
    The channel axis is an outer dim, so the axis-1 reductions are still plain
    elementwise VPU work over C slices.
    """
    x = x_ref[...].astype(jnp.float32)
    sqw = sqw_ref[...].astype(jnp.float32)
    m = jnp.max(x, axis=1, keepdims=True)
    t = sqw * jnp.exp(x - m)
    norm_sqr = jnp.sum(t * t, axis=1, keepdims=True)
    o_ref[...] = (t * jax.lax.rsqrt(norm_sqr)).astype(o_ref.dtype)


# ----------------------------------------------------------------------------
# Tiling heuristics
# ----------------------------------------------------------------------------
def _block_target_bytes():
    """~2 MiB blocks by default; ~4 MiB on v7x (faster HBM -> per-step overhead
    hurts more).  v7x is detected by its 64 MiB-per-TensorCore VMEM."""
    try:
        info = pltpu.get_tpu_info()
        vmem = getattr(info, "vmem_capacity_bytes", None)
        if vmem is not None and vmem <= 64 * 1024 * 1024:
            return 4 << 20
    except Exception:
        pass
    return 2 << 20


def _choose_tiles(B, C, L, row_tile, itemsize, *, target_bytes,
                  vmem_budget_bytes, min_steps=8):
    """Pick (TB, TR): batch tile and spatial-row tile (rows of 128 lanes).

    Priorities:
      1. real VMEM cost (2x in-bufs + 2x out-bufs + f32 working set) fits budget,
      2. >= min_steps total grid steps (when that much work exists) and an even
         step count (so both v7x TensorCores double-buffer and finish together),
      3. block bytes as close to target_bytes as possible without exceeding it,
      4. grow the spatial tile before the batch tile (longer contiguous DMA
         rows, lane-dense output stores).
    """
    def block_bytes(tb, tr):
        return tb * C * tr * 128 * itemsize          # C is an outer dim: no sublane padding

    def f32_working_bytes(tb, tr):
        return tb * C * tr * 128 * 4                 # per-channel f32 slabs live in-kernel

    tr_opts = [r for r in range(row_tile, L + 1, row_tile) if L % r == 0]
    tb_opts = [tb for tb in range(1, B + 1) if B % tb == 0]
    max_steps = B * (L // row_tile)
    need_steps = min(min_steps, max_steps)
    want_even = max_steps >= 2

    best, best_key = None, None
    for tr in tr_opts:
        for tb in tb_opts:
            bb = block_bytes(tb, tr)
            if 4 * bb + 2 * f32_working_bytes(tb, tr) > vmem_budget_bytes:
                continue
            steps = (B // tb) * (L // tr)
            over = bb > target_bytes
            key = (
                steps >= need_steps,                  # enough steps to pipeline / split cores
                (steps % 2 == 0) or not want_even,    # even split across 2 TCs
                not over,                             # prefer staying under the byte target
                -bb if over else bb,                  # then as large as allowed
                tr,                                   # grow spatial tile first
                tb,
            )
            if best_key is None or key > best_key:
                best_key, best = key, (tb, tr)
    if best is None:                                  # pathological (huge C): smallest legal block
        best = (1, row_tile)
    return best


# ----------------------------------------------------------------------------
# Wrapper
# ----------------------------------------------------------------------------
def weighted_sqrt_softmax_pallas(x_nchw, weights=None):
    """x_nchw: (B, C, H, W). weights: (C,) non-negative (assumed to sum to 1).

    Note: if all weights are zero (violating the module's assumption), the norm
    vanishes and the output is Inf/NaN -- identical to the reference behavior.
    """
    B, C, H, W = x_nchw.shape
    T = H * W
    dtype = x_nchw.dtype
    itemsize = jnp.dtype(dtype).itemsize
    sublane = max(8, 32 // itemsize)                  # 8 (f32) / 16 (bf16) / 32 (int8)

    if weights is None:
        weights = jnp.ones((C,), dtype=jnp.float32)
    weights = jnp.asarray(weights, dtype=jnp.float32)
    assert weights.shape == (C,)
    sqw = jnp.sqrt(weights)                           # only sqrt(w) is needed in-kernel

    # Flatten spatial dims and pad up to a multiple of sublane*128 so the
    # spatial dim can be viewed as dense (rows, 128) tiles (padded pixels are
    # computed on zeros and sliced off afterwards).
    row_elems = sublane * 128
    T_pad = ((T + row_elems - 1) // row_elems) * row_elems
    x = x_nchw.reshape(B, C, T)
    if T_pad != T:
        x = jnp.pad(x, ((0, 0), (0, 0), (0, T_pad - T)))
    L = T_pad // 128
    x = x.reshape(B, C, L, 128)                       # minor-dim split: free reshape

    target_bytes = _block_target_bytes()
    vmem_limit = 32 << 20        # raises v5e's 16 MiB scoped default; matches v6e/v7x default
    pipeline_budget = 24 << 20   # checked in _choose_tiles against the real block cost
    TB, TR = _choose_tiles(B, C, L, sublane, itemsize,
                           target_bytes=target_bytes,
                           vmem_budget_bytes=pipeline_budget)
    grid = (B // TB, L // TR)

    cost = pl.CostEstimate(
        flops=6 * B * C * T_pad,
        transcendentals=B * C * T_pad + B * T_pad,    # exp per element + rsqrt per pixel
        bytes_accessed=2 * B * C * T_pad * itemsize,  # stream x in, stream out once
    )
    compiler_params = pltpu.CompilerParams(
        dimension_semantics=("parallel", "parallel"),
        vmem_limit_bytes=vmem_limit,
    )
    out_shape = jax.ShapeDtypeStruct((B, C, L, 128), dtype)
    data_spec = lambda extra: None  # placeholder to keep lambdas below readable

    if C <= 32:
        # Unrolled-channel path: sqrt(weights) lives in SMEM via scalar prefetch.
        out = pl.pallas_call(
            _wss_kernel_unrolled,
            out_shape=out_shape,
            grid_spec=pltpu.PrefetchScalarGridSpec(
                num_scalar_prefetch=1,
                grid=grid,
                in_specs=[
                    pl.BlockSpec((TB, C, TR, 128), lambda b, t, sw_ref: (b, 0, t, 0)),
                ],
                out_specs=pl.BlockSpec((TB, C, TR, 128), lambda b, t, sw_ref: (b, 0, t, 0)),
            ),
            compiler_params=compiler_params,
            cost_estimate=cost,
        )(sqw, x)
    else:
        # Large-C fallback: vectorized channel reduction, sqrt(weights) in VMEM.
        out = pl.pallas_call(
            _wss_kernel_vector,
            out_shape=out_shape,
            grid_spec=pltpu.PrefetchScalarGridSpec(
                num_scalar_prefetch=0,
                grid=grid,
                in_specs=[
                    pl.BlockSpec((TB, C, TR, 128), lambda b, t: (b, 0, t, 0)),
                    pl.BlockSpec((1, C, 1, 1), lambda b, t: (0, 0, 0, 0)),
                ],
                out_specs=pl.BlockSpec((TB, C, TR, 128), lambda b, t: (b, 0, t, 0)),
            ),
            compiler_params=compiler_params,
            cost_estimate=cost,
        )(x, sqw.reshape(1, C, 1, 1))

    out = out.reshape(B, C, T_pad)
    if T_pad != T:
        out = out[:, :, :T]
    return out.reshape(B, C, H, W)


# ----------------------------------------------------------------------------
# Reference + test
# ----------------------------------------------------------------------------
def _reference(x_nchw, weights):
    # pure-JAX reference matching the PyTorch code (dim=1)
    w = weights.reshape(1, -1, 1, 1)
    m = jnp.max(x_nchw, axis=1, keepdims=True)
    e = jnp.exp(x_nchw - m)
    norm = jnp.sqrt(jnp.sum(w * e * e, axis=1, keepdims=True))
    return jnp.sqrt(w) * e / norm


if __name__ == "__main__":
    key = jax.random.PRNGKey(0)
    B, C, H, W = 2, 4, 16, 16
    kx, _ = jax.random.split(key)
    x = jax.random.normal(kx, (B, C, H, W), dtype=jnp.float32)
    # deterministic non-uniform weights that sum to one (as the module assumes)
    raw_w = jnp.arange(1, C + 1, dtype=jnp.float32)
    weights = raw_w / jnp.sum(raw_w)

    out = jax.block_until_ready(weighted_sqrt_softmax_pallas(x, weights))

    ref = _reference(x, weights)
    assert out.shape == x.shape
    assert jnp.allclose(out, ref, atol=1e-5, rtol=1e-5), "mismatch vs reference"
    # squares sum to 1 along the channel dim
    assert jnp.allclose(jnp.sum(out * out, axis=1), 1.0, atol=1e-5)

    print("KERNEL_OK")
</pallas_src>

<mosaic_0001>
module attributes {stable_mosaic.version = 11 : i64} {
  func.func @_wss_kernel_unrolled(%arg0: i32, %arg1: i32, %arg2: memref<4xf32, #tpu.memory_space<smem>>, %arg3: memref<1x4x8x128xf32, #tpu.memory_space<vmem>>, %arg4: memref<1x4x8x128xf32, #tpu.memory_space<vmem>>) attributes {dimension_semantics = [#tpu.dimension_semantics<parallel>, #tpu.dimension_semantics<parallel>], iteration_bounds = array<i64: 2, 1>, scalar_prefetch = 1 : i64, scratch_operands = 0 : i64, tpu.core_type = #tpu.core_type<tc>, window_params = [{transform_indices = @transform_0, window_bounds = array<i64: 1, 4, 8, 128>}, {transform_indices = @transform_1, window_bounds = array<i64: 1, 4, 8, 128>}]} {
    %c0 = arith.constant 0 : index
    %c0_0 = arith.constant 0 : index
    %c0_1 = arith.constant 0 : index
    %c0_2 = arith.constant 0 : index
    %0 = vector.load %arg3[%c0, %c0_0, %c0_1, %c0_2] : memref<1x4x8x128xf32, #tpu.memory_space<vmem>>, vector<1x1x8x128xf32>
    %1 = vector.shape_cast %0 : vector<1x1x8x128xf32> to vector<1x8x128xf32>
    %c0_3 = arith.constant 0 : index
    %c1 = arith.constant 1 : index
    %c0_4 = arith.constant 0 : index
    %c0_5 = arith.constant 0 : index
    %2 = vector.load %arg3[%c0_3, %c1, %c0_4, %c0_5] : memref<1x4x8x128xf32, #tpu.memory_space<vmem>>, vector<1x1x8x128xf32>
    %3 = vector.shape_cast %2 : vector<1x1x8x128xf32> to vector<1x8x128xf32>
    %4 = arith.maximumf %1, %3 : vector<1x8x128xf32>
    %c0_6 = arith.constant 0 : index
    %c2 = arith.constant 2 : index
    %c0_7 = arith.constant 0 : index
    %c0_8 = arith.constant 0 : index
    %5 = vector.load %arg3[%c0_6, %c2, %c0_7, %c0_8] : memref<1x4x8x128xf32, #tpu.memory_space<vmem>>, vector<1x1x8x128xf32>
    %6 = vector.shape_cast %5 : vector<1x1x8x128xf32> to vector<1x8x128xf32>
    %7 = arith.maximumf %4, %6 : vector<1x8x128xf32>
    %c0_9 = arith.constant 0 : index
    %c3 = arith.constant 3 : index
    %c0_10 = arith.constant 0 : index
    %c0_11 = arith.constant 0 : index
    %8 = vector.load %arg3[%c0_9, %c3, %c0_10, %c0_11] : memref<1x4x8x128xf32, #tpu.memory_space<vmem>>, vector<1x1x8x128xf32>
    %9 = vector.shape_cast %8 : vector<1x1x8x128xf32> to vector<1x8x128xf32>
    %10 = arith.maximumf %7, %9 : vector<1x8x128xf32>
    %c0_12 = arith.constant 0 : index
    %11 = memref.load %arg2[%c0_12] : memref<4xf32, #tpu.memory_space<smem>>
    %c0_13 = arith.constant 0 : index
    %c0_14 = arith.constant 0 : index
    %c0_15 = arith.constant 0 : index
    %c0_16 = arith.constant 0 : index
    %12 = vector.load %arg3[%c0_13, %c0_14, %c0_15, %c0_16] : memref<1x4x8x128xf32, #tpu.memory_space<vmem>>, vector<1x1x8x128xf32>
    %13 = vector.shape_cast %12 : vector<1x1x8x128xf32> to vector<1x8x128xf32>
    %14 = arith.subf %13, %10 : vector<1x8x128xf32>
    %15 = math.exp %14 : vector<1x8x128xf32>
    %16 = vector.broadcast %11 : f32 to vector<1x8x128xf32>
    %17 = arith.mulf %16, %15 : vector<1x8x128xf32>
    %18 = arith.mulf %17, %17 : vector<1x8x128xf32>
    %c1_17 = arith.constant 1 : index
    %19 = memref.load %arg2[%c1_17] : memref<4xf32, #tpu.memory_space<smem>>
    %c0_18 = arith.constant 0 : index
    %c1_19 = arith.constant 1 : index
    %c0_20 = arith.constant 0 : index
    %c0_21 = arith.constant 0 : index
    %20 = vector.load %arg3[%c0_18, %c1_19, %c0_20, %c0_21] : memref<1x4x8x128xf32, #tpu.memory_space<vmem>>, vector<1x1x8x128xf32>
    %21 = vector.shape_cast %20 : vector<1x1x8x128xf32> to vector<1x8x128xf32>
    %22 = arith.subf %21, %10 : vector<1x8x128xf32>
    %23 = math.exp %22 : vector<1x8x128xf32>
    %24 = vector.broadcast %19 : f32 to vector<1x8x128xf32>
    %25 = arith.mulf %24, %23 : vector<1x8x128xf32>
    %26 = arith.mulf %25, %25 : vector<1x8x128xf32>
    %27 = arith.addf %18, %26 : vector<1x8x128xf32>
    %c2_22 = arith.constant 2 : index
    %28 = memref.load %arg2[%c2_22] : memref<4xf32, #tpu.memory_space<smem>>
    %c0_23 = arith.constant 0 : index
    %c2_24 = arith.constant 2 : index
    %c0_25 = arith.constant 0 : index
    %c0_26 = arith.constant 0 : index
    %29 = vector.load %arg3[%c0_23, %c2_24, %c0_25, %c0_26] : memref<1x4x8x128xf32, #tpu.memory_space<vmem>>, vector<1x1x8x128xf32>
    %30 = vector.shape_cast %29 : vector<1x1x8x128xf32> to vector<1x8x128xf32>
    %31 = arith.subf %30, %10 : vector<1x8x128xf32>
    %32 = math.exp %31 : vector<1x8x128xf32>
    %33 = vector.broadcast %28 : f32 to vector<1x8x128xf32>
    %34 = arith.mulf %33, %32 : vector<1x8x128xf32>
    %35 = arith.mulf %34, %34 : vector<1x8x128xf32>
    %36 = arith.addf %27, %35 : vector<1x8x128xf32>
    %c3_27 = arith.constant 3 : index
    %37 = memref.load %arg2[%c3_27] : memref<4xf32, #tpu.memory_space<smem>>
    %c0_28 = arith.constant 0 : index
    %c3_29 = arith.constant 3 : index
    %c0_30 = arith.constant 0 : index
    %c0_31 = arith.constant 0 : index
    %38 = vector.load %arg3[%c0_28, %c3_29, %c0_30, %c0_31] : memref<1x4x8x128xf32, #tpu.memory_space<vmem>>, vector<1x1x8x128xf32>
    %39 = vector.shape_cast %38 : vector<1x1x8x128xf32> to vector<1x8x128xf32>
    %40 = arith.subf %39, %10 : vector<1x8x128xf32>
    %41 = math.exp %40 : vector<1x8x128xf32>
    %42 = vector.broadcast %37 : f32 to vector<1x8x128xf32>
    %43 = arith.mulf %42, %41 : vector<1x8x128xf32>
    %44 = arith.mulf %43, %43 : vector<1x8x128xf32>
    %45 = arith.addf %36, %44 : vector<1x8x128xf32>
    %46 = math.rsqrt %45 : vector<1x8x128xf32>
    %47 = arith.mulf %17, %46 : vector<1x8x128xf32>
    %c0_32 = arith.constant 0 : index
    %c0_33 = arith.constant 0 : index
    %c0_34 = arith.constant 0 : index
    %c0_35 = arith.constant 0 : index
    %48 = vector.load %arg4[%c0_32, %c0_33, %c0_34, %c0_35] : memref<1x4x8x128xf32, #tpu.memory_space<vmem>>, vector<1x1x8x128xf32>
    %49 = vector.shape_cast %48 : vector<1x1x8x128xf32> to vector<1x8x128xf32>
    %50 = vector.shape_cast %47 : vector<1x8x128xf32> to vector<1x1x8x128xf32>
    tpu.vector_store %arg4[%c0_32, %c0_33, %c0_34, %c0_35], %50 {strides = array<i32>} : memref<1x4x8x128xf32, #tpu.memory_space<vmem>>, vector<1x1x8x128xf32>,
    %51 = arith.mulf %25, %46 : vector<1x8x128xf32>
    %c0_36 = arith.constant 0 : index
    %c1_37 = arith.constant 1 : index
    %c0_38 = arith.constant 0 : index
    %c0_39 = arith.constant 0 : index
    %52 = vector.load %arg4[%c0_36, %c1_37, %c0_38, %c0_39] : memref<1x4x8x128xf32, #tpu.memory_space<vmem>>, vector<1x1x8x128xf32>
    %53 = vector.shape_cast %52 : vector<1x1x8x128xf32> to vector<1x8x128xf32>
    %54 = vector.shape_cast %51 : vector<1x8x128xf32> to vector<1x1x8x128xf32>
    tpu.vector_store %arg4[%c0_36, %c1_37, %c0_38, %c0_39], %54 {strides = array<i32>} : memref<1x4x8x128xf32, #tpu.memory_space<vmem>>, vector<1x1x8x128xf32>,
    %55 = arith.mulf %34, %46 : vector<1x8x128xf32>
    %c0_40 = arith.constant 0 : index
    %c2_41 = arith.constant 2 : index
    %c0_42 = arith.constant 0 : index
    %c0_43 = arith.constant 0 : index
    %56 = vector.load %arg4[%c0_40, %c2_41, %c0_42, %c0_43] : memref<1x4x8x128xf32, #tpu.memory_space<vmem>>, vector<1x1x8x128xf32>
    %57 = vector.shape_cast %56 : vector<1x1x8x128xf32> to vector<1x8x128xf32>
    %58 = vector.shape_cast %55 : vector<1x8x128xf32> to vector<1x1x8x128xf32>
    tpu.vector_store %arg4[%c0_40, %c2_41, %c0_42, %c0_43], %58 {strides = array<i32>} : memref<1x4x8x128xf32, #tpu.memory_space<vmem>>, vector<1x1x8x128xf32>,
    %59 = arith.mulf %43, %46 : vector<1x8x128xf32>
    %c0_44 = arith.constant 0 : index
    %c3_45 = arith.constant 3 : index
    %c0_46 = arith.constant 0 : index
    %c0_47 = arith.constant 0 : index
    %60 = vector.load %arg4[%c0_44, %c3_45, %c0_46, %c0_47] : memref<1x4x8x128xf32, #tpu.memory_space<vmem>>, vector<1x1x8x128xf32>
    %61 = vector.shape_cast %60 : vector<1x1x8x128xf32> to vector<1x8x128xf32>
    %62 = vector.shape_cast %59 : vector<1x8x128xf32> to vector<1x1x8x128xf32>
    tpu.vector_store %arg4[%c0_44, %c3_45, %c0_46, %c0_47], %62 {strides = array<i32>} : memref<1x4x8x128xf32, #tpu.memory_space<vmem>>, vector<1x1x8x128xf32>,
    return
  }
  func.func @transform_0(%arg0: i32, %arg1: i32, %arg2: memref<4xf32, #tpu.memory_space<smem>>) -> (i32, i32, i32, i32) {
    %c0_i32 = arith.constant 0 : i32
    %c0_i32_0 = arith.constant 0 : i32
    %c0_i32_1 = arith.constant 0 : i32
    return %arg0, %c0_i32, %arg1, %c0_i32_0 : i32, i32, i32, i32
  }
  func.func @transform_1(%arg0: i32, %arg1: i32, %arg2: memref<4xf32, #tpu.memory_space<smem>>) -> (i32, i32, i32, i32) {
    %c0_i32 = arith.constant 0 : i32
    %c0_i32_0 = arith.constant 0 : i32
    %c0_i32_1 = arith.constant 0 : i32
    return %arg0, %c0_i32, %arg1, %c0_i32_0 : i32, i32, i32, i32
  }
}

</mosaic_0001>

<llo_original>
// kernel: tpu_custom_call.1
$region0: #{tpu_custom_call.1}
  #allocation0 [shape = 'u32[]', space=smem, size = 0x4, offset = 0x4, fixed_abs, tag = 'smem constant byte address 0x4 - core index']
  #allocation1 [shape = 'u32[144,128]{1,0:T(1,128)}', space=vmem, size = 0x12000, scoped, tag = 'internal scratch']
  #allocation2 [shape = 's32[1]{0}', space=sflag, size = 0x4, scoped, tag = 'scoped memory for tpu_custom_call.1']
  #allocation3 [shape = 'u8[512]{0}', space=smem, size = 0x200, scoped, tag = 'prefetched SMEM operand 0']
  %s0 = inlined_call_operand.hbm [shape: f32[4], index: 0, kind: input, shape index: {}]
  %s1 = inlined_call_operand.hbm [shape: f32[2,4,8,128], index: 1, kind: input, shape index: {}]
  %s2 = inlined_call_operand.hbm [shape: f32[2,4,8,128], index: 2, kind: output, shape index: {}]
  %s3 = sld [smem:[#allocation0]]
  $region41: #{tpu_custom_call.1} parent=0
    _
  %s5 = ssub.s32 1, %s3
  %s6 = scalar_select 0, %s5, %s3
  %8 = dma.hbm_to_smem %s0, 16, [#allocation3], [#allocation2]
  %9 = dma.done [#allocation2], 16
  %10 = sfence
  $region1: #{tpu_custom_call.1} parent=0
    #allocation4 [shape = 'u8[32768]{0}', space=vmem, size = 0x8000, scoped, tag = 'input window, operand 1']
    #allocation5 [shape = 's32[2]{0}', space=sflag, size = 0x8, scoped, tag = 'scoped memory for tpu_custom_call.1']
    #allocation6 [shape = 's32[2]{0}', space=sflag, size = 0x8, scoped, tag = 'scoped memory for tpu_custom_call.1']
    #allocation7 [shape = 'u8[32768]{0}', space=vmem, size = 0x8000, scoped, tag = 'output window, operand 0']
    %11 = vsyncpa [#allocation5], 0
    %s12 = scalar_lea.sflag [#allocation5], 1
    %13 = vsyncpa %s12, 0
    %14 = vsyncpa [#allocation6], 0
    %s15 = scalar_lea.sflag [#allocation6], 1
    %16 = vsyncpa %s15, 0
    loop: start=0, step=1, limit=4
    $region2: #{tpu_custom_call.1} parent=1 // loop_pre_header
      _
    $region3: #{tpu_custom_call.1} parent=1 // loop_header
      %s18 = sphi 0, %s22
      %p19 = scmp.ge.s32.totalorder %s18, 4
      %s25 = sphi 0, %s37
      %s26 = sphi 0, %s33
      %s27 = sphi 0, %s25
      %s28 = sphi 0, %s26
      %s29 = sphi 0, %s27
      %s30 = sphi 0, %s28
      %s42 = sphi 0, %s44
      %s45 = sphi 0, %s42
      %s46 = sphi 0, %s45
      %s62 = sphi 0, %s46
      %s70 = sphi 0, %s72
      %s73 = sphi 0, %s70
      %s74 = sphi 0, %s73
      %s90 = sphi 0, %s74
    $region4: #{tpu_custom_call.1} parent=1 // loop_header_branch
      %21 = sbr.rel (%p19) target = $region8
    $region5: #{tpu_custom_call.1} parent=1 // loop_body
      %s23 = ssub.s32 %s18, 1
      %s24 = ssub.s32 %s18, 2
      %s31 = sadd.s32 1, %s26
      %p32 = scmp.ge.s32.totalorder %s31, 1
      %s33 = scalar_select %p32, 0, %s31
      %s34 = sadd.s32 1, %s25
      %s35 = scalar_select %p32, %s34, %s25
      %p36 = scmp.ge.s32.totalorder %s35, 2
      %s37 = scalar_select %p36, 0, %s35
      %s38 = ssub.s32 %s25, %s37
      %s39 = ssub.s32 %s26, %s33
      %s40 = sor.u32 %s38, %s39
      %p41 = scmp.eq.s32.totalorder %s40, 0
      %s43 = sadd.s32 %s42, 1
      %s44 = scalar_select %p41, %s42, %s43
      %p47 = pneg %p41
      %p48 = scmp.eq.s32.totalorder %s18, 1
      %p49 = por %p47, %p48
      %p50 = scmp.ne.s32.totalorder %s42, %s45
      %p51 = scmp.eq.s32.totalorder %s18, 0
      %p52 = por %p50, %p51
      %p53 = scmp.ne.s32.totalorder %s42, %s45
      %p54 = scmp.eq.s32.totalorder %s23, 1
      %p55 = por %p53, %p54
      %p56 = scmp.ne.s32.totalorder %s45, %s46
      %p57 = scmp.eq.s32.totalorder %s23, 0
      %p58 = por %p56, %p57
      %p59 = scmp.ne.s32.totalorder %s45, %s46
      %p60 = scmp.eq.s32.totalorder %s24, 1
      %p61 = por %p59, %p60
      %p63 = scmp.ne.s32.totalorder %s46, %s62
      %p64 = scmp.eq.s32.totalorder %s24, 0
      %p65 = por %p63, %p64
      %s66 = ssub.s32 %s25, %s37
      %s67 = ssub.s32 %s26, %s33
      %s68 = sor.u32 %s66, %s67
      %p69 = scmp.eq.s32.totalorder %s68, 0
      %s71 = sadd.s32 %s70, 1
      %s72 = scalar_select %p69, %s70, %s71
      %p75 = pneg %p69
      %p76 = scmp.eq.s32.totalorder %s18, 1
      %p77 = por %p75, %p76
      %p78 = scmp.ne.s32.totalorder %s70, %s73
      %p79 = scmp.eq.s32.totalorder %s18, 0
      %p80 = por %p78, %p79
      %p81 = scmp.ne.s32.totalorder %s70, %s73
      %p82 = scmp.eq.s32.totalorder %s23, 1
      %p83 = por %p81, %p82
      %p84 = scmp.ne.s32.totalorder %s73, %s74
      %p85 = scmp.eq.s32.totalorder %s23, 0
      %p86 = por %p84, %p85
      %p87 = scmp.ne.s32.totalorder %s73, %s74
      %p88 = scmp.eq.s32.totalorder %s24, 1
      %p89 = por %p87, %p88
      %p91 = scmp.ne.s32.totalorder %s74, %s90
      %p92 = scmp.eq.s32.totalorder %s24, 0
      %p93 = por %p91, %p92
      %p94 = scmp.le.s32.totalorder 1, %s18
      %p95 = scmp.lt.s32.totalorder %s18, 3
      %p96 = pnand %p94, %p95
      %p97 = pneg %p96
      // Predicated region
      $region9: #{tpu_custom_call.1} parent=5 // pred_check
        _
      $region10: #{tpu_custom_call.1} parent=5 // pred_check_branch
        %99 = sbr.rel (%p96) target = $region12
      $region11: #{tpu_custom_call.1} parent=5 // pred_region
        %s100 = ssub.s32 %s18, 1
      $region12: #{tpu_custom_call.1} parent=5 // pred_fallthru
        _
      %p101 = scmp.lt.s32.totalorder %s18, 2
      // Predicated region
      $region13: #{tpu_custom_call.1} parent=5 // pred_check
        %p102 = pneg %p101
      $region14: #{tpu_custom_call.1} parent=5 // pred_check_branch
        %104 = sbr.rel (%p102) target = $region16
      $region15: #{tpu_custom_call.1} parent=5 // pred_region
        // Predicated region
        $region17: #{tpu_custom_call.1} parent=15 // pred_check
          %p105 = pneg %p52
        $region18: #{tpu_custom_call.1} parent=15 // pred_check_branch
          %107 = sbr.rel (%p105) target = $region20
        $region19: #{tpu_custom_call.1} parent=15 // pred_region
          %s108 = sand.u32 %s42, 1
          %s109 = scalar_lea.sflag [#allocation5], %s108
          %s110 = sand.u32 %s42, 1
          %s111 = smul.addr %s110, 32
          %s112 = scalar_lea.vmem [#allocation4], %s111
          %s114 = ssub.s32 512, 512
          %115 = vsyncadd %s109, %s114
          %s116 = smul.addr %s25, 4
          %s117 = sadd.s32 %s26, %s116
          %s118 = smul.addr %s117, 128
          %s119 = scalar_lea.hbm %s1, %s118
          %s120 = sshll.u32 %s112, 4
          %s121 = int_to_ptr.vmem [resolvable:$true] %s120
          %126 = dma.hbm_to_vmem [thread:$0]  %s119, 512, %s121, %s109, 128, 128, 8
        $region20: #{tpu_custom_call.1} parent=15 // pred_fallthru
          _
      $region16: #{tpu_custom_call.1} parent=5 // pred_fallthru
        _
      %p127 = scmp.le.s32.totalorder 1, %s18
      %p128 = scmp.lt.s32.totalorder %s18, 3
      %p129 = pnand %p127, %p128
      %p130 = pneg %p129
      // Predicated region
      $region21: #{tpu_custom_call.1} parent=5 // pred_check
        _
      $region22: #{tpu_custom_call.1} parent=5 // pred_check_branch
        %132 = sbr.rel (%p129) target = $region24
      $region23: #{tpu_custom_call.1} parent=5 // pred_region
        %s133 = ssub.s32 %s18, 1
        %s134 = sand.u32 %s45, 1
        %s135 = scalar_lea.sflag [#allocation5], %s134
        %s136 = sand.u32 %s45, 1
        %s137 = smul.addr %s136, 32
        %s138 = scalar_lea.vmem [#allocation4], %s137
        // Predicated region
        $region25: #{tpu_custom_call.1} parent=23 // pred_check
          %p139 = pneg %p58
        $region26: #{tpu_custom_call.1} parent=23 // pred_check_branch
          %141 = sbr.rel (%p139) target = $region28
        $region27: #{tpu_custom_call.1} parent=23 // pred_region
          %142 = dma.done %s135, 512
        $region28: #{tpu_custom_call.1} parent=23 // pred_fallthru
          _
        %s143 = sand.u32 %s45, 1
        %s144 = scalar_lea.sflag [#allocation5], %s143
        %s145 = sand.u32 %s45, 1
        %s146 = smul.addr %s145, 32
        %s147 = scalar_lea.vmem [#allocation4], %s146
        %p148 = pneg %p58
        %p149 = pneg %p55
        %p150 = pneg %p86
        %p151 = pneg %p83
        %s152 = sand.u32 %s73, 1
        %s153 = scalar_lea.sflag [#allocation6], %s152
        %s154 = sand.u32 %s73, 1
        %s155 = smul.addr %s154, 32
        %s156 = scalar_lea.vmem [#allocation7], %s155
        %v157 = vld [vmem:[%s138] sm:$0xff]
        %s158 = scalar_lea.vmem %s138, 8 [#allocation4]
        %v159 = vld [vmem:[%s158] sm:$0xff]
        %v160 = vmax.f32 %v157, %v159
        %s161 = scalar_lea.vmem %s138, 16 [#allocation4]
        %v162 = vld [vmem:[%s161] sm:$0xff]
        %v163 = vmax.f32 %v160, %v162
        %s164 = scalar_lea.vmem %s138, 24 [#allocation4]
        %v165 = vld [vmem:[%s164] sm:$0xff]
        %v166 = vmax.f32 %v163, %v165
        %s167 = sld [smem:[#allocation3]]
        %v168 = vsub.f32 %v157, %v166
        %v169 = vmul.f32 %v168, 1.442695
        %v170 = vpow.pop %v169
        %v171 = vstv %s167
        %v172 = vmul.f32 %v171, %v170
        %v173 = vmul.f32 %v172, %v172
        %s174 = sld [smem:[#allocation3 + $0x1]]
        %v175 = vsub.f32 %v159, %v166
        %v176 = vmul.f32 %v175, 1.442695
        %v177 = vpow.pop %v176
        %v178 = vstv %s174
        %v179 = vmul.f32 %v178, %v177
        %v180 = vmul.f32 %v179, %v179
        %v181 = vadd.f32 %v173, %v180
        %s182 = sld [smem:[#allocation3 + $0x2]]
        %v183 = vsub.f32 %v162, %v166
        %v184 = vmul.f32 %v183, 1.442695
        %v185 = vpow.pop %v184
        %v186 = vstv %s182
        %v187 = vmul.f32 %v186, %v185
        %v188 = vmul.f32 %v187, %v187
        %v189 = vadd.f32 %v181, %v188
        %s190 = sld [smem:[#allocation3 + $0x3]]
        %v191 = vsub.f32 %v165, %v166
        %v192 = vmul.f32 %v191, 1.442695
        %v193 = vpow.pop %v192
        %v194 = vstv %s190
        %v195 = vmul.f32 %v194, %v193
        %v196 = vmul.f32 %v195, %v195
        %v197 = vadd.f32 %v189, %v196
        %v198 = vrsqrt.pop %v197
        %v199 = vmul.f32 %v172, %v198
        %200 = vst [vmem:[%s156] sm:$0xff] %v199
        %v201 = vmul.f32 %v179, %v198
        %s202 = scalar_lea.vmem %s156, 8 [#allocation7]
        %203 = vst [vmem:[%s202] sm:$0xff] %v201
        %v204 = vmul.f32 %v187, %v198
        %s205 = scalar_lea.vmem %s156, 16 [#allocation7]
        %206 = vst [vmem:[%s205] sm:$0xff] %v204
        %v207 = vmul.f32 %v195, %v198
        %s208 = scalar_lea.vmem %s156, 24 [#allocation7]
        %209 = vst [vmem:[%s208] sm:$0xff] %v207
        %s210 = sand.u32 %s73, 1
        %s211 = scalar_lea.sflag [#allocation6], %s210
        %s212 = sand.u32 %s73, 1
        %s213 = smul.addr %s212, 32
        %s214 = scalar_lea.vmem [#allocation7], %s213
        // Predicated region
        $region29: #{tpu_custom_call.1} parent=23 // pred_check
          %p215 = pneg %p83
        $region30: #{tpu_custom_call.1} parent=23 // pred_check_branch
          %217 = sbr.rel (%p215) target = $region32
        $region31: #{tpu_custom_call.1} parent=23 // pred_region
          %s219 = ssub.s32 512, 512
          %220 = vsyncadd %s211, %s219
          %s221 = smul.addr %s27, 4
          %s222 = sadd.s32 %s28, %s221
          %s223 = smul.addr %s222, 128
          %s224 = scalar_lea.hbm %s2, %s223
          %s225 = sshll.u32 %s214, 4
          %s226 = int_to_ptr.vmem [resolvable:$true] %s225
          %231 = dma.vmem_to_hbm [thread:$0]  %s226, 512, %s224, %s211, 128, 128, 8
        $region32: #{tpu_custom_call.1} parent=23 // pred_fallthru
          _
      $region24: #{tpu_custom_call.1} parent=5 // pred_fallthru
        _
      %p232 = scmp.le.s32.totalorder 2, %s18
      // Predicated region
      $region33: #{tpu_custom_call.1} parent=5 // pred_check
        %p233 = pneg %p232
      $region34: #{tpu_custom_call.1} parent=5 // pred_check_branch
        %235 = sbr.rel (%p233) target = $region36
      $region35: #{tpu_custom_call.1} parent=5 // pred_region
        %s236 = ssub.s32 %s18, 2
        // Predicated region
        $region37: #{tpu_custom_call.1} parent=35 // pred_check
          %p237 = pneg %p89
        $region38: #{tpu_custom_call.1} parent=35 // pred_check_branch
          %239 = sbr.rel (%p237) target = $region40
        $region39: #{tpu_custom_call.1} parent=35 // pred_region
          %s240 = sand.u32 %s74, 1
          %s241 = scalar_lea.sflag [#allocation6], %s240
          %s242 = sand.u32 %s74, 1
          %s243 = smul.addr %s242, 32
          %s244 = scalar_lea.vmem [#allocation7], %s243
          %245 = dma.done %s241, 512
        $region40: #{tpu_custom_call.1} parent=35 // pred_fallthru
          _
      $region36: #{tpu_custom_call.1} parent=5 // pred_fallthru
        _
    $region6: #{tpu_custom_call.1} parent=1 // loop_footer
      %s22 = sadd.s32 1, %s18
    $region7: #{tpu_custom_call.1} parent=1 // loop_footer_branch
      %17 = sbr.rel target = $region3
    $region8: #{tpu_custom_call.1} parent=1 // loop_exit
      _
    %246 = vsyncpa [#allocation5], 1
    %s247 = scalar_lea.sflag [#allocation5], 1
    %248 = vsyncpa %s247, 1
    %249 = vsyncpa [#allocation6], 1
    %s250 = scalar_lea.sflag [#allocation6], 1
    %251 = vsyncpa %s250, 1

</llo_original>
